<compile_context>
chip_gen: v7x
topology: tpu7x:2x2x1
jax: 0.10.0
libtpu: 0.0.40
codegen_flags: <defaults>
</compile_context>

<pallas_src>
import math

import jax
import jax.numpy as jnp
from jax import lax
from jax.experimental import pallas as pl
from jax.experimental.pallas import tpu as pltpu

# ---- static hyper-parameters (CausalConv1d defaults; kernel assumes these) ---
KERNEL_SIZE = 3
DILATION = 1
STRIDE = 1            # TODO(synk): stride > 1 / dilation > 1 variants not supported here.
CAUSAL_PADDING = DILATION * (KERNEL_SIZE - 1) + (1 - STRIDE)       # = 2
PAD_MODE = "reflect"


def _round_up(x, m):
    return (x + m - 1) // m * m


def _vmem_capacity_bytes():
    """Physical VMEM of the current TPU generation (fallback: assume v7x 64 MiB)."""
    try:
        return int(pltpu.get_tpu_info().vmem_capacity_bytes)
    except Exception:
        return 64 << 20


def _residual_cconv_kernel(x_ref, halo_ref, w_ref, b_ref, o_ref):
    """One (batch, T-tile) block per grid step; no carried state.

    x_ref:    (1, T_TILE, C)   native dtype, channels-last, lane-dense C
    halo_ref: (1, 8, C)        previous tile's last 8 rows (garbage at t == 0)
    w_ref:    (K, C, C)        one (C_in, C_out) MXU operand per tap
    b_ref:    (1, C)           f32 bias row
    o_ref:    (1, T_TILE, C)
    """
    t = pl.program_id(1)
    x_tile = x_ref[0]                                      # (T_TILE, C)
    t_tile = x_tile.shape[0]

    # Left halo rows (causal context): previous tile's last 2 rows, or the
    # 2-row reflect pad (x[2], x[1]) for the first tile of each batch element.
    h_prev = halo_ref[0, 6:8, :]                           # (2, C)
    h_refl = jnp.concatenate([x_ref[0, 2:3, :], x_ref[0, 1:2, :]], axis=0)
    h = jnp.where(t == 0, h_refl, h_prev)                  # (2, C)

    # Per-tap partials: all MXU operands come straight from the aligned x tile
    # (no window copy, no sublane-misaligned reads), f32 accumulation.
    # TODO(synk): im2col alternative (single (T, 3C) @ (3C, C) matmul) when the
    # contraction depth is the bottleneck (v5e at large C).
    p0 = jnp.dot(x_tile, w_ref[0], preferred_element_type=jnp.float32)
    p1 = jnp.dot(x_tile, w_ref[1], preferred_element_type=jnp.float32)
    p2 = jnp.dot(x_tile, w_ref[2], preferred_element_type=jnp.float32)

    # Tiny halo matmuls that patch the first rows after the sublane rolls.
    hp0 = jnp.dot(h, w_ref[0], preferred_element_type=jnp.float32)   # (2, C)
    hp1 = jnp.dot(h, w_ref[1], preferred_element_type=jnp.float32)   # (2, C)

    # Causal time shifts on the f32 partials: roll down the sublane axis (XLU),
    # then overwrite the wrapped-around leading rows with the halo terms.
    row = lax.broadcasted_iota(jnp.int32, (t_tile, 1), 0)
    p1s = jnp.where(row >= 1, pltpu.roll(p1, shift=1, axis=0), hp1[1:2, :])
    p0s = jnp.where(row >= 2, pltpu.roll(p0, shift=2, axis=0),
                    jnp.where(row >= 1, hp0[1:2, :], hp0[0:1, :]))

    # Epilogue: bias + residual (Residual.forward = fn(x) + x), single store.
    out = p2 + p1s + p0s + b_ref[...] + x_tile.astype(jnp.float32)
    o_ref[0] = out.astype(o_ref.dtype)


def _pick_t_tile(T, C_pad, itemsize, vmem_cap):
    """Largest 128-aligned divisor of T whose per-step pipeline footprint fits
    a generation-aware VMEM budget (v5e/v6e: 128 MiB physical, v7x: 64 MiB)."""
    if T % 128 != 0:
        return T                       # single full-T block (T already % 8 == 0)
    # Fixed footprint: double-buffered weights + bias + halo blocks.
    # TODO(synk): pipeline_mode=pl.Buffered(1) on the constant weight/bias specs
    # would halve this on v7x; budgeted for 2 buffers here instead.
    fixed = 2 * (KERNEL_SIZE * C_pad * C_pad * itemsize        # weight block
                 + C_pad * 4                                   # bias (f32)
                 + 8 * C_pad * itemsize)                       # halo block
    budget = max(int(vmem_cap * 0.45) - fixed, 2 << 20)
    # Per output row: double-buffered x-in + out block (native dtype) plus
    # ~16 B/chan of f32 partials / rolled copies / accumulator temporaries.
    per_row = 4 * C_pad * itemsize + 16 * C_pad
    max_rows = max(128, budget // max(per_row, 1))
    max_tile = 2048 if vmem_cap >= (96 << 20) else 1024
    limit = min(T, max_rows, max_tile)
    tile, cand = 128, 128
    while cand <= limit:
        if T % cand == 0:
            tile = cand
        cand += 128
    return int(tile)


def residual_causal_conv1d_ntc(x_ntc, weight, bias, *, t_tile=None):
    """out = CausalConv1d(weight, bias)(x) + x, channels-last (B, T, C)."""
    B, T, C = x_ntc.shape
    C_out, C_in_w, K = weight.shape
    assert K == KERNEL_SIZE and C_in_w == C
    assert C_out == C, "Residual requires fn(x) to preserve the shape of x"
    assert STRIDE == 1 and DILATION == 1
    assert T > CAUSAL_PADDING, "reflect padding needs T > pad"

    dtype = x_ntc.dtype
    itemsize = jnp.dtype(dtype).itemsize
    C_pad = _round_up(max(C, 128), 128)       # lane-dense channels
    T_pad = _round_up(T, 8)                   # sublane-aligned time

    x_p = x_ntc
    if (C_pad, T_pad) != (C, T):
        # Tail T padding is harmless for a causal conv; padded channels carry
        # zero weights / bias, so the padded outputs are sliced off untouched.
        x_p = jnp.pad(x_ntc, ((0, 0), (0, T_pad - T), (0, C_pad - C)))

    # (C_out, C_in, K) -> (K, C_in, C_out): one MXU operand per tap, fed in the
    # activation dtype (no f32 upcast on the MXU operands).
    w_kio = jnp.transpose(weight, (2, 1, 0)).astype(dtype)
    b_vec = bias
    if C_pad != C:
        w_kio = jnp.pad(w_kio, ((0, 0), (0, C_pad - C), (0, C_pad - C)))
        b_vec = jnp.pad(bias, (0, C_pad - C))
    b_row = b_vec.astype(jnp.float32).reshape(1, C_pad)

    vmem_cap = _vmem_capacity_bytes()
    if t_tile is None:
        t_tile = _pick_t_tile(T_pad, C_pad, itemsize, vmem_cap)
    assert T_pad % t_tile == 0 and t_tile % 8 == 0 and t_tile >= 8
    n_t = T_pad // t_tile
    bpt = t_tile // 8        # number of 8-row halo blocks per T tile

    out = pl.pallas_call(
        _residual_cconv_kernel,
        out_shape=jax.ShapeDtypeStruct((B, T_pad, C_pad), dtype),
        grid_spec=pltpu.PrefetchScalarGridSpec(
            num_scalar_prefetch=0,
            grid=(B, n_t),
            in_specs=[
                # current tile
                pl.BlockSpec((1, t_tile, C_pad), lambda b, t: (b, t, 0)),
                # previous tile's last 8 rows (clamped at t == 0; the kernel
                # substitutes the reflect pad there)
                pl.BlockSpec((1, 8, C_pad),
                             lambda b, t: (b, jnp.maximum(t * bpt - 1, 0), 0)),
                pl.BlockSpec((K, C_pad, C_pad), lambda b, t: (0, 0, 0)),
                pl.BlockSpec((1, C_pad), lambda b, t: (0, 0)),
            ],
            out_specs=pl.BlockSpec((1, t_tile, C_pad), lambda b, t: (b, t, 0)),
        ),
        compiler_params=pltpu.CompilerParams(
            # No carried state -> grid is order-independent: both axes parallel
            # (v7x 2-TC megacore usable even at B = 1-2).
            dimension_semantics=("parallel", "parallel"),
            # Generation-aware: ~96 MiB on v5e/v6e (128 MiB physical),
            # ~48 MiB on v7x (64 MiB physical).
            vmem_limit_bytes=int(vmem_cap * 3 // 4),
        ),
    )(x_p, x_p, w_kio, b_row)

    if (C_pad, T_pad) != (C, T):
        out = out[:, :T, :C]
    return out


def residual_causal_conv1d(x_ncw, weight, bias, *, t_tile=None):
    """PyTorch-layout adapter: x (B, C, T) -> (B, C, T).

    The transposes only adapt the NCW interface to the channels-last kernel; a
    channels-last JAX model should call residual_causal_conv1d_ntc directly and
    pay no transpose / HBM round-trip cost."""
    # TODO(synk): for NCW-native hot paths, fuse the layout change into the
    # kernel (read (1, C, T_TILE) blocks + pltpu.einshape) instead of XLA transposes.
    y_ntc = residual_causal_conv1d_ntc(
        jnp.transpose(x_ncw, (0, 2, 1)), weight, bias, t_tile=t_tile)
    return jnp.transpose(y_ntc, (0, 2, 1))


def _reference_ncw(x_ncw, weight, bias):
    """Pure-JAX reference mirroring Residual(CausalConv1d)."""
    x_pad = jnp.pad(x_ncw, ((0, 0), (0, 0), (CAUSAL_PADDING, 0)), mode=PAD_MODE)
    conv = lax.conv_general_dilated(
        x_pad, weight, window_strides=(STRIDE,), padding="VALID",
        rhs_dilation=(DILATION,), dimension_numbers=("NCH", "OIH", "NCH"))
    return conv + bias[None, :, None] + x_ncw


if __name__ == "__main__":
    key = jax.random.PRNGKey(0)
    kx, kx2, kx3, kw, kb, kw3, kb3 = jax.random.split(key, 7)

    # Small shape implied by the module: batch=2, dim=8, seq=16.
    B, C, T = 2, 8, 16
    fan_in = C * KERNEL_SIZE
    bound = 1.0 / math.sqrt(fan_in)
    weight = jax.random.uniform(kw, (C, C, KERNEL_SIZE),
                                minval=-bound, maxval=bound, dtype=jnp.float32)
    bias = jax.random.uniform(kb, (C,), minval=-bound, maxval=bound,
                              dtype=jnp.float32)

    # 1) Single tile, tiny C (channel-padding path), reflect halo.
    x = jax.random.normal(kx, (B, C, T), dtype=jnp.float32)
    out = jax.block_until_ready(residual_causal_conv1d(x, weight, bias))
    ref = _reference_ncw(x, weight, bias)
    assert out.shape == (B, C, T)
    assert jnp.allclose(out, ref, atol=1e-5, rtol=1e-5), "single-tile mismatch"

    # 2) Multi-tile: halo block carried across T tiles (T=256, T_TILE=128).
    x2 = jax.random.normal(kx2, (B, C, 256), dtype=jnp.float32)
    out2 = jax.block_until_ready(
        residual_causal_conv1d(x2, weight, bias, t_tile=128))
    ref2 = _reference_ncw(x2, weight, bias)
    assert jnp.allclose(out2, ref2, atol=1e-5, rtol=1e-5), "multi-tile mismatch"

    # 3) Lane-dense channels (no padding path), multi-tile.
    C3 = 128
    bound3 = 1.0 / math.sqrt(C3 * KERNEL_SIZE)
    weight3 = jax.random.uniform(kw3, (C3, C3, KERNEL_SIZE),
                                 minval=-bound3, maxval=bound3, dtype=jnp.float32)
    bias3 = jax.random.uniform(kb3, (C3,), minval=-bound3, maxval=bound3,
                               dtype=jnp.float32)
    x3 = jax.random.normal(kx3, (B, C3, 256), dtype=jnp.float32)
    out3 = jax.block_until_ready(
        residual_causal_conv1d(x3, weight3, bias3, t_tile=128))
    ref3 = _reference_ncw(x3, weight3, bias3)
    assert jnp.allclose(out3, ref3, atol=1e-4, rtol=1e-4), "C=128 mismatch"

    print("KERNEL_OK")
</pallas_src>

<mosaic_0001>
module attributes {stable_mosaic.version = 11 : i64} {
  func.func @_residual_cconv_kernel(%arg0: i32, %arg1: i32, %arg2: memref<1x16x128xf32, #tpu.memory_space<vmem>>, %arg3: memref<1x8x128xf32, #tpu.memory_space<vmem>>, %arg4: memref<3x128x128xf32, #tpu.memory_space<vmem>>, %arg5: memref<1x128xf32, #tpu.memory_space<vmem>>, %arg6: memref<1x16x128xf32, #tpu.memory_space<vmem>>) attributes {dimension_semantics = [#tpu.dimension_semantics<parallel>, #tpu.dimension_semantics<parallel>], iteration_bounds = array<i64: 2, 1>, scalar_prefetch = 0 : i64, scratch_operands = 0 : i64, tpu.core_type = #tpu.core_type<tc>, window_params = [{transform_indices = @transform_0, window_bounds = array<i64: 1, 16, 128>}, {transform_indices = @transform_1, window_bounds = array<i64: 1, 8, 128>}, {pipeline_mode = #tpu.pipeline_mode<synchronous>, transform_indices = @transform_2, window_bounds = array<i64: 3, 128, 128>}, {pipeline_mode = #tpu.pipeline_mode<synchronous>, transform_indices = @transform_3, window_bounds = array<i64: 1, 128>}, {transform_indices = @transform_4, window_bounds = array<i64: 1, 16, 128>}]} {
    %c0 = arith.constant 0 : index
    %c0_0 = arith.constant 0 : index
    %c0_1 = arith.constant 0 : index
    %0 = vector.load %arg2[%c0, %c0_0, %c0_1] : memref<1x16x128xf32, #tpu.memory_space<vmem>>, vector<1x16x128xf32>
    %1 = vector.shape_cast %0 : vector<1x16x128xf32> to vector<16x128xf32>
    %c0_2 = arith.constant 0 : index
    %c6 = arith.constant 6 : index
    %c0_3 = arith.constant 0 : index
    %2 = vector.load %arg3[%c0_2, %c6, %c0_3] : memref<1x8x128xf32, #tpu.memory_space<vmem>>, vector<1x2x128xf32>
    %3 = vector.shape_cast %2 : vector<1x2x128xf32> to vector<2x128xf32>
    %c0_4 = arith.constant 0 : index
    %c2 = arith.constant 2 : index
    %c0_5 = arith.constant 0 : index
    %4 = vector.load %arg2[%c0_4, %c2, %c0_5] : memref<1x16x128xf32, #tpu.memory_space<vmem>>, vector<1x1x128xf32>
    %5 = vector.shape_cast %4 : vector<1x1x128xf32> to vector<1x128xf32>
    %c0_6 = arith.constant 0 : index
    %c1 = arith.constant 1 : index
    %c0_7 = arith.constant 0 : index
    %6 = vector.load %arg2[%c0_6, %c1, %c0_7] : memref<1x16x128xf32, #tpu.memory_space<vmem>>, vector<1x1x128xf32>
    %7 = vector.shape_cast %6 : vector<1x1x128xf32> to vector<1x128xf32>
    %8 = tpu.concatenate %5, %7 in 0 : vector<1x128xf32>, vector<1x128xf32> -> vector<2x128xf32>
    %c0_i32 = arith.constant 0 : i32
    %9 = arith.cmpi eq, %arg1, %c0_i32 : i32
    %10 = arith.select %9, %8, %3 : vector<2x128xf32>
    %c0_8 = arith.constant 0 : index
    %c0_9 = arith.constant 0 : index
    %c0_10 = arith.constant 0 : index
    %11 = vector.load %arg4[%c0_8, %c0_9, %c0_10] : memref<3x128x128xf32, #tpu.memory_space<vmem>>, vector<1x128x128xf32>
    %12 = vector.shape_cast %11 : vector<1x128x128xf32> to vector<128x128xf32>
    %cst = arith.constant dense<0.000000e+00> : vector<16x128xf32>
    %13 = tpu.matmul %1, %12, %cst {dimension_numbers = #tpu.dot_dimension_numbers<[1], [0], [0], [1], [0, 0, 1, 1], [], []>} : vector<16x128xf32>, vector<128x128xf32>, vector<16x128xf32> -> vector<16x128xf32>
    %c1_11 = arith.constant 1 : index
    %c0_12 = arith.constant 0 : index
    %c0_13 = arith.constant 0 : index
    %14 = vector.load %arg4[%c1_11, %c0_12, %c0_13] : memref<3x128x128xf32, #tpu.memory_space<vmem>>, vector<1x128x128xf32>
    %15 = vector.shape_cast %14 : vector<1x128x128xf32> to vector<128x128xf32>
    %cst_14 = arith.constant dense<0.000000e+00> : vector<16x128xf32>
    %16 = tpu.matmul %1, %15, %cst_14 {dimension_numbers = #tpu.dot_dimension_numbers<[1], [0], [0], [1], [0, 0, 1, 1], [], []>} : vector<16x128xf32>, vector<128x128xf32>, vector<16x128xf32> -> vector<16x128xf32>
    %c2_15 = arith.constant 2 : index
    %c0_16 = arith.constant 0 : index
    %c0_17 = arith.constant 0 : index
    %17 = vector.load %arg4[%c2_15, %c0_16, %c0_17] : memref<3x128x128xf32, #tpu.memory_space<vmem>>, vector<1x128x128xf32>
    %18 = vector.shape_cast %17 : vector<1x128x128xf32> to vector<128x128xf32>
    %cst_18 = arith.constant dense<0.000000e+00> : vector<16x128xf32>
    %19 = tpu.matmul %1, %18, %cst_18 {dimension_numbers = #tpu.dot_dimension_numbers<[1], [0], [0], [1], [0, 0, 1, 1], [], []>} : vector<16x128xf32>, vector<128x128xf32>, vector<16x128xf32> -> vector<16x128xf32>
    %c0_19 = arith.constant 0 : index
    %c0_20 = arith.constant 0 : index
    %c0_21 = arith.constant 0 : index
    %20 = vector.load %arg4[%c0_19, %c0_20, %c0_21] : memref<3x128x128xf32, #tpu.memory_space<vmem>>, vector<1x128x128xf32>
    %21 = vector.shape_cast %20 : vector<1x128x128xf32> to vector<128x128xf32>
    %cst_22 = arith.constant dense<0.000000e+00> : vector<2x128xf32>
    %22 = tpu.matmul %10, %21, %cst_22 {dimension_numbers = #tpu.dot_dimension_numbers<[1], [0], [0], [1], [0, 0, 1, 1], [], []>} : vector<2x128xf32>, vector<128x128xf32>, vector<2x128xf32> -> vector<2x128xf32>
    %c1_23 = arith.constant 1 : index
    %c0_24 = arith.constant 0 : index
    %c0_25 = arith.constant 0 : index
    %23 = vector.load %arg4[%c1_23, %c0_24, %c0_25] : memref<3x128x128xf32, #tpu.memory_space<vmem>>, vector<1x128x128xf32>
    %24 = vector.shape_cast %23 : vector<1x128x128xf32> to vector<128x128xf32>
    %cst_26 = arith.constant dense<0.000000e+00> : vector<2x128xf32>
    %25 = tpu.matmul %10, %24, %cst_26 {dimension_numbers = #tpu.dot_dimension_numbers<[1], [0], [0], [1], [0, 0, 1, 1], [], []>} : vector<2x128xf32>, vector<128x128xf32>, vector<2x128xf32> -> vector<2x128xf32>
    %26 = tpu.iota {dimensions = array<i32: 0>} : vector<16x1xi32>
    %c1_i32 = arith.constant 1 : i32
    %27 = vector.broadcast %c1_i32 : i32 to vector<16x1xi32>
    %28 = arith.cmpi sge, %26, %27 : vector<16x1xi32>
    %c1_i32_27 = arith.constant 1 : i32
    %29 = tpu.dynamic_rotate %16 by %c1_i32_27 dim 0 : vector<16x128xf32>, i32 -> vector<16x128xf32>
    %30 = vector.extract_strided_slice %25 {offsets = [1, 0], sizes = [1, 128], strides = [1, 1]} : vector<2x128xf32> to vector<1x128xf32>
    %31 = vector.shape_cast %28 : vector<16x1xi1> to vector<16x1xi1>
    %32 = vector.broadcast %31 : vector<16x1xi1> to vector<16x128xi1>
    %33 = vector.shape_cast %30 : vector<1x128xf32> to vector<1x128xf32>
    %34 = vector.broadcast %33 : vector<1x128xf32> to vector<16x128xf32>
    %35 = arith.select %32, %29, %34 : vector<16x128xi1>, vector<16x128xf32>
    %c2_i32 = arith.constant 2 : i32
    %36 = vector.broadcast %c2_i32 : i32 to vector<16x1xi32>
    %37 = arith.cmpi sge, %26, %36 : vector<16x1xi32>
    %c2_i32_28 = arith.constant 2 : i32
    %38 = tpu.dynamic_rotate %13 by %c2_i32_28 dim 0 : vector<16x128xf32>, i32 -> vector<16x128xf32>
    %c1_i32_29 = arith.constant 1 : i32
    %39 = vector.broadcast %c1_i32_29 : i32 to vector<16x1xi32>
    %40 = arith.cmpi sge, %26, %39 : vector<16x1xi32>
    %41 = vector.extract_strided_slice %22 {offsets = [1, 0], sizes = [1, 128], strides = [1, 1]} : vector<2x128xf32> to vector<1x128xf32>
    %42 = vector.extract_strided_slice %22 {offsets = [0, 0], sizes = [1, 128], strides = [1, 1]} : vector<2x128xf32> to vector<1x128xf32>
    %43 = vector.shape_cast %40 : vector<16x1xi1> to vector<16x1xi1>
    %44 = vector.broadcast %43 : vector<16x1xi1> to vector<16x128xi1>
    %45 = vector.shape_cast %41 : vector<1x128xf32> to vector<1x128xf32>
    %46 = vector.broadcast %45 : vector<1x128xf32> to vector<16x128xf32>
    %47 = vector.shape_cast %42 : vector<1x128xf32> to vector<1x128xf32>
    %48 = vector.broadcast %47 : vector<1x128xf32> to vector<16x128xf32>
    %49 = arith.select %44, %46, %48 : vector<16x128xi1>, vector<16x128xf32>
    %50 = vector.shape_cast %37 : vector<16x1xi1> to vector<16x1xi1>
    %51 = vector.broadcast %50 : vector<16x1xi1> to vector<16x128xi1>
    %52 = arith.select %51, %38, %49 : vector<16x128xi1>, vector<16x128xf32>
    %53 = arith.addf %19, %35 : vector<16x128xf32>
    %54 = arith.addf %53, %52 : vector<16x128xf32>
    %c0_30 = arith.constant 0 : index
    %c0_31 = arith.constant 0 : index
    %55 = vector.load %arg5[%c0_30, %c0_31] : memref<1x128xf32, #tpu.memory_space<vmem>>, vector<1x128xf32>
    %56 = vector.broadcast %55 : vector<1x128xf32> to vector<16x128xf32>
    %57 = arith.addf %54, %56 : vector<16x128xf32>
    %58 = arith.addf %57, %1 : vector<16x128xf32>
    %c0_32 = arith.constant 0 : index
    %c0_33 = arith.constant 0 : index
    %c0_34 = arith.constant 0 : index
    %59 = vector.load %arg6[%c0_32, %c0_33, %c0_34] : memref<1x16x128xf32, #tpu.memory_space<vmem>>, vector<1x16x128xf32>
    %60 = vector.shape_cast %59 : vector<1x16x128xf32> to vector<16x128xf32>
    %61 = vector.shape_cast %58 : vector<16x128xf32> to vector<1x16x128xf32>
    tpu.vector_store %arg6[%c0_32, %c0_33, %c0_34], %61 {strides = array<i32>} : memref<1x16x128xf32, #tpu.memory_space<vmem>>, vector<1x16x128xf32>,
    return
  }
  func.func @transform_0(%arg0: i32, %arg1: i32) -> (i32, i32, i32) {
    %c0_i32 = arith.constant 0 : i32
    %c0_i32_0 = arith.constant 0 : i32
    return %arg0, %arg1, %c0_i32 : i32, i32, i32
  }
  func.func @transform_1(%arg0: i32, %arg1: i32) -> (i32, i32, i32) {
    %c2_i32 = arith.constant 2 : i32
    %0 = arith.muli %arg1, %c2_i32 : i32
    %c1_i32 = arith.constant 1 : i32
    %1 = arith.subi %0, %c1_i32 : i32
    %c0_i32 = arith.constant 0 : i32
    %2 = arith.maxsi %1, %c0_i32 : i32
    %c0_i32_0 = arith.constant 0 : i32
    %c0_i32_1 = arith.constant 0 : i32
    return %arg0, %2, %c0_i32_0 : i32, i32, i32
  }
  func.func @transform_2(%arg0: i32, %arg1: i32) -> (i32, i32, i32) {
    %c0_i32 = arith.constant 0 : i32
    %c0_i32_0 = arith.constant 0 : i32
    %c0_i32_1 = arith.constant 0 : i32
    %c0_i32_2 = arith.constant 0 : i32
    return %c0_i32, %c0_i32_0, %c0_i32_1 : i32, i32, i32
  }
  func.func @transform_3(%arg0: i32, %arg1: i32) -> (i32, i32) {
    %c0_i32 = arith.constant 0 : i32
    %c0_i32_0 = arith.constant 0 : i32
    %c0_i32_1 = arith.constant 0 : i32
    return %c0_i32, %c0_i32_0 : i32, i32
  }
  func.func @transform_4(%arg0: i32, %arg1: i32) -> (i32, i32, i32) {
    %c0_i32 = arith.constant 0 : i32
    %c0_i32_0 = arith.constant 0 : i32
    return %arg0, %arg1, %c0_i32 : i32, i32, i32
  }
}

</mosaic_0001>

<llo_original>
// kernel: tpu_custom_call.1
$region0: #{tpu_custom_call.1}
  #allocation0 [shape = 'u32[]', space=smem, size = 0x4, offset = 0x4, fixed_abs, tag = 'smem constant byte address 0x4 - core index']
  #allocation1 [shape = 'u32[144,128]{1,0:T(1,128)}', space=vmem, size = 0x12000, scoped, tag = 'internal scratch']
  %s0 = inlined_call_operand.hbm [shape: f32[2,16,128], index: 0, kind: input, shape index: {}]
  %s1 = inlined_call_operand.hbm [shape: f32[2,16,128], index: 1, kind: input, shape index: {}]
  %s2 = inlined_call_operand.hbm [shape: f32[3,128,128], index: 2, kind: input, shape index: {}]
  %s3 = inlined_call_operand.vmem [shape: f32[1,128], index: 3, kind: input, shape index: {}]
  %s4 = inlined_call_operand.hbm [shape: f32[2,16,128], index: 4, kind: output, shape index: {}]
  %s5 = sld [smem:[#allocation0]]
  $region61: #{tpu_custom_call.1} parent=0
    _
  %s7 = ssub.s32 1, %s5
  %s8 = scalar_select 0, %s7, %s5
  $region1: #{tpu_custom_call.1} parent=0
    #allocation2 [shape = 'u8[16384]{0}', space=vmem, size = 0x4000, scoped, tag = 'input window, operand 0']
    #allocation3 [shape = 's32[2]{0}', space=sflag, size = 0x8, scoped, tag = 'scoped memory for tpu_custom_call.1']
    #allocation4 [shape = 's32[2]{0}', space=sflag, size = 0x8, scoped, tag = 'scoped memory for tpu_custom_call.1']
    #allocation5 [shape = 'u8[8192]{0}', space=vmem, size = 0x2000, scoped, tag = 'input window, operand 1']
    #allocation6 [shape = 's32[2]{0}', space=sflag, size = 0x8, scoped, tag = 'scoped memory for tpu_custom_call.1']
    #allocation7 [shape = 'u8[196608]{0}', space=vmem, size = 0x30000, scoped, tag = 'input window, operand 2, single buffered']
    #allocation8 [shape = 'u8[16384]{0}', space=vmem, size = 0x4000, scoped, tag = 'output window, operand 0']
    %9 = vsyncpa [#allocation3], 0
    %s10 = scalar_lea.sflag [#allocation3], 1
    %11 = vsyncpa %s10, 0
    %12 = vsyncpa [#allocation6], 0
    %s13 = scalar_lea.sflag [#allocation6], 1
    %14 = vsyncpa %s13, 0
    %15 = vsyncpa [#allocation4], 0
    %s16 = scalar_lea.sflag [#allocation4], 1
    %17 = vsyncpa %s16, 0
    loop: start=0, step=1, limit=4
    $region2: #{tpu_custom_call.1} parent=1 // loop_pre_header
      _
    $region3: #{tpu_custom_call.1} parent=1 // loop_header
      %s19 = sphi 0, %s23
      %p20 = scmp.ge.s32.totalorder %s19, 4
      %s26 = sphi 0, %s38
      %s27 = sphi 0, %s34
      %s28 = sphi 0, %s26
      %s29 = sphi 0, %s27
      %s30 = sphi 0, %s28
      %s31 = sphi 0, %s29
      %s43 = sphi 0, %s45
      %s46 = sphi 0, %s43
      %s47 = sphi 0, %s46
      %s63 = sphi 0, %s47
      %s79 = sphi 0, %s81
      %s82 = sphi 0, %s79
      %s83 = sphi 0, %s82
      %s99 = sphi 0, %s83
      %s103 = sphi 0, %s103
      %s105 = sphi 0, %s103
      %s106 = sphi 0, %s105
      %s120 = sphi 0, %s106
      %s124 = sphi 0, %s124
      %s126 = sphi 0, %s124
      %s127 = sphi 0, %s126
      %s141 = sphi 0, %s127
      %s149 = sphi 0, %s151
      %s152 = sphi 0, %s149
      %s153 = sphi 0, %s152
      %s169 = sphi 0, %s153
    $region4: #{tpu_custom_call.1} parent=1 // loop_header_branch
      %22 = sbr.rel (%p20) target = $region8
    $region5: #{tpu_custom_call.1} parent=1 // loop_body
      %s24 = ssub.s32 %s19, 1
      %s25 = ssub.s32 %s19, 2
      %s32 = sadd.s32 1, %s27
      %p33 = scmp.ge.s32.totalorder %s32, 1
      %s34 = scalar_select %p33, 0, %s32
      %s35 = sadd.s32 1, %s26
      %s36 = scalar_select %p33, %s35, %s26
      %p37 = scmp.ge.s32.totalorder %s36, 2
      %s38 = scalar_select %p37, 0, %s36
      %s39 = ssub.s32 %s26, %s38
      %s40 = ssub.s32 %s27, %s34
      %s41 = sor.u32 %s39, %s40
      %p42 = scmp.eq.s32.totalorder %s41, 0
      %s44 = sadd.s32 %s43, 1
      %s45 = scalar_select %p42, %s43, %s44
      %p48 = pneg %p42
      %p49 = scmp.eq.s32.totalorder %s19, 1
      %p50 = por %p48, %p49
      %p51 = scmp.ne.s32.totalorder %s43, %s46
      %p52 = scmp.eq.s32.totalorder %s19, 0
      %p53 = por %p51, %p52
      %p54 = scmp.ne.s32.totalorder %s43, %s46
      %p55 = scmp.eq.s32.totalorder %s24, 1
      %p56 = por %p54, %p55
      %p57 = scmp.ne.s32.totalorder %s46, %s47
      %p58 = scmp.eq.s32.totalorder %s24, 0
      %p59 = por %p57, %p58
      %p60 = scmp.ne.s32.totalorder %s46, %s47
      %p61 = scmp.eq.s32.totalorder %s25, 1
      %p62 = por %p60, %p61
      %p64 = scmp.ne.s32.totalorder %s47, %s63
      %p65 = scmp.eq.s32.totalorder %s25, 0
      %p66 = por %p64, %p65
      %s67 = smul.u32 %s27, 2
      %s68 = ssub.s32 %s67, 1
      %p69 = scmp.gt.s32.totalorder %s68, 0
      %s70 = scalar_select %p69, %s68, 0
      %s71 = smul.u32 %s34, 2
      %s72 = ssub.s32 %s71, 1
      %p73 = scmp.gt.s32.totalorder %s72, 0
      %s74 = scalar_select %p73, %s72, 0
      %s75 = ssub.s32 %s26, %s38
      %s76 = ssub.s32 %s70, %s74
      %s77 = sor.u32 %s75, %s76
      %p78 = scmp.eq.s32.totalorder %s77, 0
      %s80 = sadd.s32 %s79, 1
      %s81 = scalar_select %p78, %s79, %s80
      %p84 = pneg %p78
      %p85 = scmp.eq.s32.totalorder %s19, 1
      %p86 = por %p84, %p85
      %p87 = scmp.ne.s32.totalorder %s79, %s82
      %p88 = scmp.eq.s32.totalorder %s19, 0
      %p89 = por %p87, %p88
      %p90 = scmp.ne.s32.totalorder %s79, %s82
      %p91 = scmp.eq.s32.totalorder %s24, 1
      %p92 = por %p90, %p91
      %p93 = scmp.ne.s32.totalorder %s82, %s83
      %p94 = scmp.eq.s32.totalorder %s24, 0
      %p95 = por %p93, %p94
      %p96 = scmp.ne.s32.totalorder %s82, %s83
      %p97 = scmp.eq.s32.totalorder %s25, 1
      %p98 = por %p96, %p97
      %p100 = scmp.ne.s32.totalorder %s83, %s99
      %p101 = scmp.eq.s32.totalorder %s25, 0
      %p102 = por %p100, %p101
      %s104 = sadd.s32 %s103, 1
      %p107 = scmp.eq.s32.totalorder %s19, 1
      %p108 = scmp.ne.s32.totalorder %s103, %s105
      %p109 = scmp.eq.s32.totalorder %s19, 0
      %p110 = por %p108, %p109
      %p111 = scmp.ne.s32.totalorder %s103, %s105
      %p112 = scmp.eq.s32.totalorder %s24, 1
      %p113 = por %p111, %p112
      %p114 = scmp.ne.s32.totalorder %s105, %s106
      %p115 = scmp.eq.s32.totalorder %s24, 0
      %p116 = por %p114, %p115
      %p117 = scmp.ne.s32.totalorder %s105, %s106
      %p118 = scmp.eq.s32.totalorder %s25, 1
      %p119 = por %p117, %p118
      %p121 = scmp.ne.s32.totalorder %s106, %s120
      %p122 = scmp.eq.s32.totalorder %s25, 0
      %p123 = por %p121, %p122
      %s125 = sadd.s32 %s124, 1
      %p128 = scmp.eq.s32.totalorder %s19, 1
      %p129 = scmp.ne.s32.totalorder %s124, %s126
      %p130 = scmp.eq.s32.totalorder %s19, 0
      %p131 = por %p129, %p130
      %p132 = scmp.ne.s32.totalorder %s124, %s126
      %p133 = scmp.eq.s32.totalorder %s24, 1
      %p134 = por %p132, %p133
      %p135 = scmp.ne.s32.totalorder %s126, %s127
      %p136 = scmp.eq.s32.totalorder %s24, 0
      %p137 = por %p135, %p136
      %p138 = scmp.ne.s32.totalorder %s126, %s127
      %p139 = scmp.eq.s32.totalorder %s25, 1
      %p140 = por %p138, %p139
      %p142 = scmp.ne.s32.totalorder %s127, %s141
      %p143 = scmp.eq.s32.totalorder %s25, 0
      %p144 = por %p142, %p143
      %s145 = ssub.s32 %s26, %s38
      %s146 = ssub.s32 %s27, %s34
      %s147 = sor.u32 %s145, %s146
      %p148 = scmp.eq.s32.totalorder %s147, 0
      %s150 = sadd.s32 %s149, 1
      %s151 = scalar_select %p148, %s149, %s150
      %p154 = pneg %p148
      %p155 = scmp.eq.s32.totalorder %s19, 1
      %p156 = por %p154, %p155
      %p157 = scmp.ne.s32.totalorder %s149, %s152
      %p158 = scmp.eq.s32.totalorder %s19, 0
      %p159 = por %p157, %p158
      %p160 = scmp.ne.s32.totalorder %s149, %s152
      %p161 = scmp.eq.s32.totalorder %s24, 1
      %p162 = por %p160, %p161
      %p163 = scmp.ne.s32.totalorder %s152, %s153
      %p164 = scmp.eq.s32.totalorder %s24, 0
      %p165 = por %p163, %p164
      %p166 = scmp.ne.s32.totalorder %s152, %s153
      %p167 = scmp.eq.s32.totalorder %s25, 1
      %p168 = por %p166, %p167
      %p170 = scmp.ne.s32.totalorder %s153, %s169
      %p171 = scmp.eq.s32.totalorder %s25, 0
      %p172 = por %p170, %p171
      %p173 = scmp.le.s32.totalorder 1, %s19
      %p174 = scmp.lt.s32.totalorder %s19, 3
      %p175 = pnand %p173, %p174
      %p176 = pneg %p175
      // Predicated region
      $region9: #{tpu_custom_call.1} parent=5 // pred_check
        _
      $region10: #{tpu_custom_call.1} parent=5 // pred_check_branch
        %178 = sbr.rel (%p175) target = $region12
      $region11: #{tpu_custom_call.1} parent=5 // pred_region
        %s179 = ssub.s32 %s19, 1
        // Predicated region
        $region13: #{tpu_custom_call.1} parent=11 // pred_check
          %p180 = pneg %p116
        $region14: #{tpu_custom_call.1} parent=11 // pred_check_branch
          %182 = sbr.rel (%p180) target = $region16
        $region15: #{tpu_custom_call.1} parent=11 // pred_region
          %s184 = ssub.s32 6144, 6144
          %185 = vsyncadd [#allocation6], %s184
          %s186 = sshll.u32 [#allocation7], 4
          %s187 = int_to_ptr.vmem [resolvable:$true] %s186
          %192 = dma.hbm_to_vmem [thread:$0]  %s2, 6144, %s187, [#allocation6], 128, 128, 8
        $region16: #{tpu_custom_call.1} parent=11 // pred_fallthru
          _
        // Predicated region
        $region17: #{tpu_custom_call.1} parent=11 // pred_check
          %p193 = pneg %p137
        $region18: #{tpu_custom_call.1} parent=11 // pred_check_branch
          %195 = sbr.rel (%p193) target = $region20
        $region19: #{tpu_custom_call.1} parent=11 // pred_region
          _
        $region20: #{tpu_custom_call.1} parent=11 // pred_fallthru
          _
      $region12: #{tpu_custom_call.1} parent=5 // pred_fallthru
        _
      %p196 = scmp.lt.s32.totalorder %s19, 2
      // Predicated region
      $region21: #{tpu_custom_call.1} parent=5 // pred_check
        %p197 = pneg %p196
      $region22: #{tpu_custom_call.1} parent=5 // pred_check_branch
        %199 = sbr.rel (%p197) target = $region24
      $region23: #{tpu_custom_call.1} parent=5 // pred_region
        // Predicated region
        $region25: #{tpu_custom_call.1} parent=23 // pred_check
          %p200 = pneg %p53
        $region26: #{tpu_custom_call.1} parent=23 // pred_check_branch
          %202 = sbr.rel (%p200) target = $region28
        $region27: #{tpu_custom_call.1} parent=23 // pred_region
          %s203 = sand.u32 %s43, 1
          %s204 = scalar_lea.sflag [#allocation3], %s203
          %s205 = sand.u32 %s43, 1
          %s206 = smul.addr %s205, 16
          %s207 = scalar_lea.vmem [#allocation2], %s206
          %s208 = smul.u32 2, %s27
          %s210 = ssub.s32 256, 256
          %211 = vsyncadd %s204, %s210
          %s212 = smul.addr %s26, 2
          %s213 = sadd.s32 %s208, %s212
          %s214 = smul.addr %s213, 128
          %s215 = scalar_lea.hbm %s0, %s214
          %s216 = sshll.u32 %s207, 4
          %s217 = int_to_ptr.vmem [resolvable:$true] %s216
          %222 = dma.hbm_to_vmem [thread:$0]  %s215, 256, %s217, %s204, 128, 128, 8
        $region28: #{tpu_custom_call.1} parent=23 // pred_fallthru
          _
        // Predicated region
        $region29: #{tpu_custom_call.1} parent=23 // pred_check
          %p223 = pneg %p89
        $region30: #{tpu_custom_call.1} parent=23 // pred_check_branch
          %225 = sbr.rel (%p223) target = $region32
        $region31: #{tpu_custom_call.1} parent=23 // pred_region
          %s226 = sand.u32 %s19, 1
          %s227 = scalar_lea.sflag [#allocation6], %s226
          %s228 = sand.u32 %s79, 1
          %s229 = smul.addr %s228, 8
          %s230 = scalar_lea.vmem [#allocation5], %s229
          %s231 = smul.u32 %s27, 2
          %s232 = ssub.s32 %s231, 1
          %p233 = scmp.gt.s32.totalorder %s232, 0
          %s234 = scalar_select %p233, %s232, 0
          %s236 = ssub.s32 128, 128
          %237 = vsyncadd %s227, %s236
          %s238 = smul.addr %s26, 2
          %s239 = sadd.s32 %s234, %s238
          %s240 = smul.addr %s239, 128
          %s241 = scalar_lea.hbm %s1, %s240
          %s243 = sshll.u32 %s230, 4
          %s244 = int_to_ptr.vmem [resolvable:$true] %s243
          %246 = dma.hbm_to_vmem [thread:$0]  %s241, 128, %s244, %s227
        $region32: #{tpu_custom_call.1} parent=23 // pred_fallthru
          _
      $region24: #{tpu_custom_call.1} parent=5 // pred_fallthru
        _
      %p247 = scmp.le.s32.totalorder 1, %s19
      %p248 = scmp.lt.s32.totalorder %s19, 3
      %p249 = pnand %p247, %p248
      %p250 = pneg %p249
      // Predicated region
      $region33: #{tpu_custom_call.1} parent=5 // pred_check
        _
      $region34: #{tpu_custom_call.1} parent=5 // pred_check_branch
        %252 = sbr.rel (%p249) target = $region36
      $region35: #{tpu_custom_call.1} parent=5 // pred_region
        %s253 = ssub.s32 %s19, 1
        %s254 = sand.u32 %s46, 1
        %s255 = scalar_lea.sflag [#allocation3], %s254
        %s256 = sand.u32 %s46, 1
        %s257 = smul.addr %s256, 16
        %s258 = scalar_lea.vmem [#allocation2], %s257
        // Predicated region
        $region37: #{tpu_custom_call.1} parent=35 // pred_check
          %p259 = pneg %p59
        $region38: #{tpu_custom_call.1} parent=35 // pred_check_branch
          %261 = sbr.rel (%p259) target = $region40
        $region39: #{tpu_custom_call.1} parent=35 // pred_region
          %262 = dma.done %s255, 256
        $region40: #{tpu_custom_call.1} parent=35 // pred_fallthru
          _
        %s263 = sand.u32 %s24, 1
        %s264 = scalar_lea.sflag [#allocation6], %s263
        %s265 = sand.u32 %s82, 1
        %s266 = smul.addr %s265, 8
        %s267 = scalar_lea.vmem [#allocation5], %s266
        // Predicated region
        $region41: #{tpu_custom_call.1} parent=35 // pred_check
          %p268 = pneg %p95
        $region42: #{tpu_custom_call.1} parent=35 // pred_check_branch
          %270 = sbr.rel (%p268) target = $region44
        $region43: #{tpu_custom_call.1} parent=35 // pred_region
          %271 = dma.done %s264, 128
        $region44: #{tpu_custom_call.1} parent=35 // pred_fallthru
          _
        // Predicated region
        $region45: #{tpu_custom_call.1} parent=35 // pred_check
          %p272 = pneg %p116
        $region46: #{tpu_custom_call.1} parent=35 // pred_check_branch
          %274 = sbr.rel (%p272) target = $region48
        $region47: #{tpu_custom_call.1} parent=35 // pred_region
          %275 = dma.done [#allocation6], 6144
        $region48: #{tpu_custom_call.1} parent=35 // pred_fallthru
          _
        %s276 = sand.u32 %s46, 1
        %s277 = scalar_lea.sflag [#allocation3], %s276
        %s278 = sand.u32 %s46, 1
        %s279 = smul.addr %s278, 16
        %s280 = scalar_lea.vmem [#allocation2], %s279
        %p281 = pneg %p59
        %p282 = pneg %p56
        %s283 = sand.u32 %s24, 1
        %s284 = scalar_lea.sflag [#allocation6], %s283
        %s285 = sand.u32 %s82, 1
        %s286 = smul.addr %s285, 8
        %s287 = scalar_lea.vmem [#allocation5], %s286
        %p288 = pneg %p95
        %p289 = pneg %p92
        %p290 = pneg %p116
        %p291 = pneg %p113
        %p292 = pneg %p137
        %p293 = pneg %p134
        %p294 = pneg %p165
        %p295 = pneg %p162
        %s296 = sand.u32 %s152, 1
        %s297 = scalar_lea.sflag [#allocation4], %s296
        %s298 = sand.u32 %s152, 1
        %s299 = smul.addr %s298, 16
        %s300 = scalar_lea.vmem [#allocation8], %s299
        %s301 = smul.u32 2, %s29
        %s302 = smul.u32 %s29, 2
        %s303 = ssub.s32 %s302, 1
        %p304 = scmp.gt.s32.totalorder %s303, 0
        %s305 = scalar_select %p304, %s303, 0
        %s306 = smul.u32 2, %s29
        %v307 = vld [vmem:[%s258] sm:$0xff]
        %v308 = vld [vmem:[%s258 + $0x8] sm:$0xff]
        %v309 = vld [vmem:[%s267 + $0x6] sm:$0x3]
        %v310 = vld [vmem:[%s258 + $0x2] sm:$0x1]
        %v311 = vld [vmem:[%s258 + $0x1] sm:$0x1]
        %v313 = vrot.slane %v311, 7
        %vm315 = vcmask 1040384
        %v316 = vsel %vm315, %v310, %v313
        %p317 = scmp.eq.s32.totalorder %s29, 0
        %s318 = scalar_select %p317, 1, 0
        %v319 = vstv %s318
        %vm320 = vcmp.eq.s32.totalorder %v319, 1
        %v321 = vsel %vm320, %v316, %v309
        %v322 = vld [vmem:[#allocation7] sm:$0xff]
        %v323 = vld [vmem:[#allocation7 + $0x8] sm:$0xff]
        %v324 = vld [vmem:[#allocation7 + $0x10] sm:$0xff]
        %v325 = vld [vmem:[#allocation7 + $0x18] sm:$0xff]
        %v326 = vld [vmem:[#allocation7 + $0x20] sm:$0xff]
        %v327 = vld [vmem:[#allocation7 + $0x28] sm:$0xff]
        %v328 = vld [vmem:[#allocation7 + $0x30] sm:$0xff]
        %v329 = vld [vmem:[#allocation7 + $0x38] sm:$0xff]
        %v330 = vld [vmem:[#allocation7 + $0x40] sm:$0xff]
        %v331 = vld [vmem:[#allocation7 + $0x48] sm:$0xff]
        %v332 = vld [vmem:[#allocation7 + $0x50] sm:$0xff]
        %v333 = vld [vmem:[#allocation7 + $0x58] sm:$0xff]
        %v334 = vld [vmem:[#allocation7 + $0x60] sm:$0xff]
        %v335 = vld [vmem:[#allocation7 + $0x68] sm:$0xff]
        %v336 = vld [vmem:[#allocation7 + $0x70] sm:$0xff]
        %v337 = vld [vmem:[#allocation7 + $0x78] sm:$0xff]
        %338 = vmatprep.subr.mxu0 0.0
        %339 = vmatpush1.msra.mxu0 %v322
        %340 = vmatprep.subr.mxu0 0.0
        %341 = vmatpush1.msra.mxu0 %v323
        %342 = vmatprep.subr.mxu0 0.0
        %343 = vmatpush1.msra.mxu0 %v324
        %344 = vmatprep.subr.mxu0 0.0
        %345 = vmatpush1.msra.mxu0 %v325
        %346 = vmatprep.subr.mxu0 0.0
        %347 = vmatpush1.msra.mxu0 %v326
        %348 = vmatprep.subr.mxu0 0.0
        %349 = vmatpush1.msra.mxu0 %v327
        %350 = vmatprep.subr.mxu0 0.0
        %351 = vmatpush1.msra.mxu0 %v328
        %352 = vmatprep.subr.mxu0 0.0
        %353 = vmatpush1.msra.mxu0 %v329
        %354 = vmatprep.subr.mxu0 0.0
        %355 = vmatpush1.msra.mxu0 %v330
        %356 = vmatprep.subr.mxu0 0.0
        %357 = vmatpush1.msra.mxu0 %v331
        %358 = vmatprep.subr.mxu0 0.0
        %359 = vmatpush1.msra.mxu0 %v332
        %360 = vmatprep.subr.mxu0 0.0
        %361 = vmatpush1.msra.mxu0 %v333
        %362 = vmatprep.subr.mxu0 0.0
        %363 = vmatpush1.msra.mxu0 %v334
        %364 = vmatprep.subr.mxu0 0.0
        %365 = vmatpush1.msra.mxu0 %v335
        %366 = vmatprep.subr.mxu0 0.0
        %367 = vmatpush1.msra.mxu0 %v336
        %368 = vmatprep.subr.mxu0 0.0
        %369 = vmatpush1.msra.mxu0 %v337
        %370 = vmatprep.subr.mxu0 0.0
        %371 = vmatpush1.msra.mxu0 0.0
        %372 = vmatprep.subr.mxu0 0.0
        %373 = vmatpush1.msra.mxu0 0.0
        %374 = vmatprep.subr.mxu0 0.0
        %375 = vmatpush1.msra.mxu0 0.0
        %376 = vmatprep.subr.mxu0 0.0
        %377 = vmatpush1.msra.mxu0 0.0
        %378 = vmatprep.subr.mxu0 0.0
        %379 = vmatpush1.msra.mxu0 0.0
        %380 = vmatprep.subr.mxu0 0.0
        %381 = vmatpush1.msra.mxu0 0.0
        %382 = vmatprep.subr.mxu0 0.0
        %383 = vmatpush1.msra.mxu0 0.0
        %384 = vmatprep.subr.mxu0 0.0
        %385 = vmatpush1.msra.mxu0 0.0
        %386 = vmatprep.subr.mxu0 0.0
        %387 = vmatpush1.msra.mxu0 0.0
        %388 = vmatprep.subr.mxu0 0.0
        %389 = vmatpush1.msra.mxu0 0.0
        %390 = vmatprep.subr.mxu0 0.0
        %391 = vmatpush1.msra.mxu0 0.0
        %392 = vmatprep.subr.mxu0 0.0
        %393 = vmatpush1.msra.mxu0 0.0
        %394 = vmatprep.subr.mxu0 0.0
        %395 = vmatpush1.msra.mxu0 0.0
        %396 = vmatprep.subr.mxu0 0.0
        %397 = vmatpush1.msra.mxu0 0.0
        %398 = vmatprep.subr.mxu0 0.0
        %399 = vmatpush1.msra.mxu0 0.0
        %400 = vmatprep.subr.mxu0 0.0
        %401 = vmatpush1.msra.mxu0 0.0
        %402 = vmatprep.mubr.f32.mxu0 0.0
        %403 = vmatmul.mubr.f32.gmra.mrb[0].mxu0 %v307
        %v404 = vpop.f32.mrb[0].mxu0
        %v405 = vadd.f32 0.0, %v404
        %v406 = vpop.f32.mrb[0].mxu0
        %407 = vmatprep.mubr.f32.mxu0 0.0
        %408 = vmatmul.mubr.f32.gmra.mrb[0].mxu0 %v308
        %v409 = vpop.f32.mrb[0].mxu0
        %v410 = vadd.f32 0.0, %v409
        %v411 = vpop.f32.mrb[0].mxu0
        %412 = vdwg.mxu0
        %s413 = scalar_lea.vmem [#allocation7], 128
        %v414 = vld [vmem:[%s413] sm:$0xff]
        %v415 = vld [vmem:[%s413 + $0x8] sm:$0xff]
        %v416 = vld [vmem:[%s413 + $0x10] sm:$0xff]
        %v417 = vld [vmem:[%s413 + $0x18] sm:$0xff]
        %v418 = vld [vmem:[%s413 + $0x20] sm:$0xff]
        %v419 = vld [vmem:[%s413 + $0x28] sm:$0xff]
        %v420 = vld [vmem:[%s413 + $0x30] sm:$0xff]
        %v421 = vld [vmem:[%s413 + $0x38] sm:$0xff]
        %v422 = vld [vmem:[%s413 + $0x40] sm:$0xff]
        %v423 = vld [vmem:[%s413 + $0x48] sm:$0xff]
        %v424 = vld [vmem:[%s413 + $0x50] sm:$0xff]
        %v425 = vld [vmem:[%s413 + $0x58] sm:$0xff]
        %v426 = vld [vmem:[%s413 + $0x60] sm:$0xff]
        %v427 = vld [vmem:[%s413 + $0x68] sm:$0xff]
        %v428 = vld [vmem:[%s413 + $0x70] sm:$0xff]
        %v429 = vld [vmem:[%s413 + $0x78] sm:$0xff]
        %430 = vmatprep.subr.mxu0 0.0
        %431 = vmatpush1.msra.mxu0 %v414
        %432 = vmatprep.subr.mxu0 0.0
        %433 = vmatpush1.msra.mxu0 %v415
        %434 = vmatprep.subr.mxu0 0.0
        %435 = vmatpush1.msra.mxu0 %v416
        %436 = vmatprep.subr.mxu0 0.0
        %437 = vmatpush1.msra.mxu0 %v417
        %438 = vmatprep.subr.mxu0 0.0
        %439 = vmatpush1.msra.mxu0 %v418
        %440 = vmatprep.subr.mxu0 0.0
        %441 = vmatpush1.msra.mxu0 %v419
        %442 = vmatprep.subr.mxu0 0.0
        %443 = vmatpush1.msra.mxu0 %v420
        %444 = vmatprep.subr.mxu0 0.0
        %445 = vmatpush1.msra.mxu0 %v421
        %446 = vmatprep.subr.mxu0 0.0
        %447 = vmatpush1.msra.mxu0 %v422
        %448 = vmatprep.subr.mxu0 0.0
        %449 = vmatpush1.msra.mxu0 %v423
        %450 = vmatprep.subr.mxu0 0.0
        %451 = vmatpush1.msra.mxu0 %v424
        %452 = vmatprep.subr.mxu0 0.0
        %453 = vmatpush1.msra.mxu0 %v425
        %454 = vmatprep.subr.mxu0 0.0
        %455 = vmatpush1.msra.mxu0 %v426
        %456 = vmatprep.subr.mxu0 0.0
        %457 = vmatpush1.msra.mxu0 %v427
        %458 = vmatprep.subr.mxu0 0.0
        %459 = vmatpush1.msra.mxu0 %v428
        %460 = vmatprep.subr.mxu0 0.0
        %461 = vmatpush1.msra.mxu0 %v429
        %462 = vmatprep.subr.mxu0 0.0
        %463 = vmatpush1.msra.mxu0 0.0
        %464 = vmatprep.subr.mxu0 0.0
        %465 = vmatpush1.msra.mxu0 0.0
        %466 = vmatprep.subr.mxu0 0.0
        %467 = vmatpush1.msra.mxu0 0.0
        %468 = vmatprep.subr.mxu0 0.0
        %469 = vmatpush1.msra.mxu0 0.0
        %470 = vmatprep.subr.mxu0 0.0
        %471 = vmatpush1.msra.mxu0 0.0
        %472 = vmatprep.subr.mxu0 0.0
        %473 = vmatpush1.msra.mxu0 0.0
        %474 = vmatprep.subr.mxu0 0.0
        %475 = vmatpush1.msra.mxu0 0.0
        %476 = vmatprep.subr.mxu0 0.0
        %477 = vmatpush1.msra.mxu0 0.0
        %478 = vmatprep.subr.mxu0 0.0
        %479 = vmatpush1.msra.mxu0 0.0
        %480 = vmatprep.subr.mxu0 0.0
        %481 = vmatpush1.msra.mxu0 0.0
        %482 = vmatprep.subr.mxu0 0.0
        %483 = vmatpush1.msra.mxu0 0.0
        %484 = vmatprep.subr.mxu0 0.0
        %485 = vmatpush1.msra.mxu0 0.0
        %486 = vmatprep.subr.mxu0 0.0
        %487 = vmatpush1.msra.mxu0 0.0
        %488 = vmatprep.subr.mxu0 0.0
        %489 = vmatpush1.msra.mxu0 0.0
        %490 = vmatprep.subr.mxu0 0.0
        %491 = vmatpush1.msra.mxu0 0.0
        %492 = vmatprep.subr.mxu0 0.0
        %493 = vmatpush1.msra.mxu0 0.0
        %494 = vmatprep.mubr.f32.mxu0 0.0
        %495 = vmatmul.mubr.f32.gmra.mrb[0].mxu0 %v307
        %v496 = vpop.f32.mrb[0].mxu0
        %v497 = vadd.f32 0.0, %v496
        %v498 = vpop.f32.mrb[0].mxu0
        %499 = vmatprep.mubr.f32.mxu0 0.0
        %500 = vmatmul.mubr.f32.gmra.mrb[0].mxu0 %v308
        %v501 = vpop.f32.mrb[0].mxu0
        %v502 = vadd.f32 0.0, %v501
        %v503 = vpop.f32.mrb[0].mxu0
        %504 = vdwg.mxu0
        %s505 = scalar_lea.vmem [#allocation7], 256
        %v506 = vld [vmem:[%s505] sm:$0xff]
        %v507 = vld [vmem:[%s505 + $0x8] sm:$0xff]
        %v508 = vld [vmem:[%s505 + $0x10] sm:$0xff]
        %v509 = vld [vmem:[%s505 + $0x18] sm:$0xff]
        %v510 = vld [vmem:[%s505 + $0x20] sm:$0xff]
        %v511 = vld [vmem:[%s505 + $0x28] sm:$0xff]
        %v512 = vld [vmem:[%s505 + $0x30] sm:$0xff]
        %v513 = vld [vmem:[%s505 + $0x38] sm:$0xff]
        %v514 = vld [vmem:[%s505 + $0x40] sm:$0xff]
        %v515 = vld [vmem:[%s505 + $0x48] sm:$0xff]
        %v516 = vld [vmem:[%s505 + $0x50] sm:$0xff]
        %v517 = vld [vmem:[%s505 + $0x58] sm:$0xff]
        %v518 = vld [vmem:[%s505 + $0x60] sm:$0xff]
        %v519 = vld [vmem:[%s505 + $0x68] sm:$0xff]
        %v520 = vld [vmem:[%s505 + $0x70] sm:$0xff]
        %v521 = vld [vmem:[%s505 + $0x78] sm:$0xff]
        %522 = vmatprep.subr.mxu0 0.0
        %523 = vmatpush1.msra.mxu0 %v322
        %524 = vmatprep.subr.mxu0 0.0
        %525 = vmatpush1.msra.mxu0 %v323
        %526 = vmatprep.subr.mxu0 0.0
        %527 = vmatpush1.msra.mxu0 %v324
        %528 = vmatprep.subr.mxu0 0.0
        %529 = vmatpush1.msra.mxu0 %v325
        %530 = vmatprep.subr.mxu0 0.0
        %531 = vmatpush1.msra.mxu0 %v326
        %532 = vmatprep.subr.mxu0 0.0
        %533 = vmatpush1.msra.mxu0 %v327
        %534 = vmatprep.subr.mxu0 0.0
        %535 = vmatpush1.msra.mxu0 %v328
        %536 = vmatprep.subr.mxu0 0.0
        %537 = vmatpush1.msra.mxu0 %v329
        %538 = vmatprep.subr.mxu0 0.0
        %539 = vmatpush1.msra.mxu0 %v330
        %540 = vmatprep.subr.mxu0 0.0
        %541 = vmatpush1.msra.mxu0 %v331
        %542 = vmatprep.subr.mxu0 0.0
        %543 = vmatpush1.msra.mxu0 %v332
        %544 = vmatprep.subr.mxu0 0.0
        %545 = vmatpush1.msra.mxu0 %v333
        %546 = vmatprep.subr.mxu0 0.0
        %547 = vmatpush1.msra.mxu0 %v334
        %548 = vmatprep.subr.mxu0 0.0
        %549 = vmatpush1.msra.mxu0 %v335
        %550 = vmatprep.subr.mxu0 0.0
        %551 = vmatpush1.msra.mxu0 %v336
        %552 = vmatprep.subr.mxu0 0.0
        %553 = vmatpush1.msra.mxu0 %v337
        %554 = vmatprep.subr.mxu0 0.0
        %555 = vmatpush1.msra.mxu0 0.0
        %556 = vmatprep.subr.mxu0 0.0
        %557 = vmatpush1.msra.mxu0 0.0
        %558 = vmatprep.subr.mxu0 0.0
        %559 = vmatpush1.msra.mxu0 0.0
        %560 = vmatprep.subr.mxu0 0.0
        %561 = vmatpush1.msra.mxu0 0.0
        %562 = vmatprep.subr.mxu0 0.0
        %563 = vmatpush1.msra.mxu0 0.0
        %564 = vmatprep.subr.mxu0 0.0
        %565 = vmatpush1.msra.mxu0 0.0
        %566 = vmatprep.subr.mxu0 0.0
        %567 = vmatpush1.msra.mxu0 0.0
        %568 = vmatprep.subr.mxu0 0.0
        %569 = vmatpush1.msra.mxu0 0.0
        %570 = vmatprep.subr.mxu0 0.0
        %571 = vmatpush1.msra.mxu0 0.0
        %572 = vmatprep.subr.mxu0 0.0
        %573 = vmatpush1.msra.mxu0 0.0
        %574 = vmatprep.subr.mxu0 0.0
        %575 = vmatpush1.msra.mxu0 0.0
        %576 = vmatprep.subr.mxu0 0.0
        %577 = vmatpush1.msra.mxu0 0.0
        %578 = vmatprep.subr.mxu0 0.0
        %579 = vmatpush1.msra.mxu0 0.0
        %580 = vmatprep.subr.mxu0 0.0
        %581 = vmatpush1.msra.mxu0 0.0
        %582 = vmatprep.subr.mxu0 0.0
        %583 = vmatpush1.msra.mxu0 0.0
        %584 = vmatprep.subr.mxu0 0.0
        %585 = vmatpush1.msra.mxu0 0.0
        %586 = vmatprep.mubr.f32.mxu0 0.0
        %587 = vmatmul.mubr.f32.gmra.mrb[0].mxu0 %v321
        %v588 = vpop.f32.mrb[0].mxu0
        %v589 = vadd.f32 0.0, %v588
        %v590 = vpop.f32.mrb[0].mxu0
        %591 = vdwg.mxu0
        %592 = vmatprep.subr.mxu0 0.0
        %593 = vmatpush1.msra.mxu0 %v414
        %594 = vmatprep.subr.mxu0 0.0
        %595 = vmatpush1.msra.mxu0 %v415
        %596 = vmatprep.subr.mxu0 0.0
        %597 = vmatpush1.msra.mxu0 %v416
        %598 = vmatprep.subr.mxu0 0.0
        %599 = vmatpush1.msra.mxu0 %v417
        %600 = vmatprep.subr.mxu0 0.0
        %601 = vmatpush1.msra.mxu0 %v418
        %602 = vmatprep.subr.mxu0 0.0
        %603 = vmatpush1.msra.mxu0 %v419
        %604 = vmatprep.subr.mxu0 0.0
        %605 = vmatpush1.msra.mxu0 %v420
        %606 = vmatprep.subr.mxu0 0.0
        %607 = vmatpush1.msra.mxu0 %v421
        %608 = vmatprep.subr.mxu0 0.0
        %609 = vmatpush1.msra.mxu0 %v422
        %610 = vmatprep.subr.mxu0 0.0
        %611 = vmatpush1.msra.mxu0 %v423
        %612 = vmatprep.subr.mxu0 0.0
        %613 = vmatpush1.msra.mxu0 %v424
        %614 = vmatprep.subr.mxu0 0.0
        %615 = vmatpush1.msra.mxu0 %v425
        %616 = vmatprep.subr.mxu0 0.0
        %617 = vmatpush1.msra.mxu0 %v426
        %618 = vmatprep.subr.mxu0 0.0
        %619 = vmatpush1.msra.mxu0 %v427
        %620 = vmatprep.subr.mxu0 0.0
        %621 = vmatpush1.msra.mxu0 %v428
        %622 = vmatprep.subr.mxu0 0.0
        %623 = vmatpush1.msra.mxu0 %v429
        %624 = vmatprep.subr.mxu0 0.0
        %625 = vmatpush1.msra.mxu0 0.0
        %626 = vmatprep.subr.mxu0 0.0
        %627 = vmatpush1.msra.mxu0 0.0
        %628 = vmatprep.subr.mxu0 0.0
        %629 = vmatpush1.msra.mxu0 0.0
        %630 = vmatprep.subr.mxu0 0.0
        %631 = vmatpush1.msra.mxu0 0.0
        %632 = vmatprep.subr.mxu0 0.0
        %633 = vmatpush1.msra.mxu0 0.0
        %634 = vmatprep.subr.mxu0 0.0
        %635 = vmatpush1.msra.mxu0 0.0
        %636 = vmatprep.subr.mxu0 0.0
        %637 = vmatpush1.msra.mxu0 0.0
        %638 = vmatprep.subr.mxu0 0.0
        %639 = vmatpush1.msra.mxu0 0.0
        %640 = vmatprep.subr.mxu0 0.0
        %641 = vmatpush1.msra.mxu0 0.0
        %642 = vmatprep.subr.mxu0 0.0
        %643 = vmatpush1.msra.mxu0 0.0
        %644 = vmatprep.subr.mxu0 0.0
        %645 = vmatpush1.msra.mxu0 0.0
        %646 = vmatprep.subr.mxu0 0.0
        %647 = vmatpush1.msra.mxu0 0.0
        %648 = vmatprep.subr.mxu0 0.0
        %649 = vmatpush1.msra.mxu0 0.0
        %650 = vmatprep.subr.mxu0 0.0
        %651 = vmatpush1.msra.mxu0 0.0
        %652 = vmatprep.subr.mxu0 0.0
        %653 = vmatpush1.msra.mxu0 0.0
        %654 = vmatprep.subr.mxu0 0.0
        %655 = vmatpush1.msra.mxu0 0.0
        %656 = vmatprep.mubr.f32.mxu0 0.0
        %657 = vmatmul.mubr.f32.gmra.mrb[0].mxu0 %v321
        %v658 = vpop.f32.mrb[0].mxu0
        %v659 = vadd.f32 0.0, %v658
        %v660 = vpop.f32.mrb[0].mxu0
        %661 = vdwg.mxu0
        %v662 = vlaneseq
        %v663 = vshrl.u32 %v662, 7
        %v664 = vadd.s32 %v663, 8
        %vm665 = vcmp.ge.s32.totalorder %v663, 1
        %vm666 = vcmp.ge.s32.totalorder %v664, 1
        %v667 = vrot.slane %v497, 7
        %v668 = vrot.slane %v502, 7
        %vm669 = vcmp.lt.s32.totalorder %v663, 1
        %v670 = vsel %vm669, %v667, %v668
        %v671 = vsel %vm669, %v668, %v667
        %v672 = vsel %vm665, 1, 0
        %v673 = vsel %vm666, 1, 0
        %vm674 = vcmp.eq.s32.totalorder %v672, 1
        %vm675 = vcmp.eq.s32.totalorder %v673, 1
        %v676 = vlaneseq
        %v677 = vshrl.u32 %v676, 7
        %v678 = vsub.s32 1, %v677
        %v679 = vrot.slane %v659, %v678
        %v680 = vsel %vm674, %v671, %v679
        %v681 = vsel %vm675, %v670, %v679
        %vm682 = vcmp.ge.s32.totalorder %v663, 2
        %vm683 = vcmp.ge.s32.totalorder %v664, 2
        %v684 = vrot.slane %v405, 6
        %v685 = vrot.slane %v410, 6
        %vm686 = vcmp.lt.s32.totalorder %v663, 2
        %v687 = vsel %vm686, %v684, %v685
        %v688 = vsel %vm686, %v685, %v684
        %v689 = vlaneseq
        %v690 = vshrl.u32 %v689, 7
        %v691 = vsub.s32 1, %v690
        %v692 = vrot.slane %v589, %v691
        %v693 = vlaneseq
        %v694 = vshrl.u32 %v693, 7
        %v695 = vsub.s32 0, %v694
        %v696 = vrot.slane %v589, %v695
        %v697 = vsel %vm674, %v692, %v696
        %v698 = vsel %vm675, %v692, %v696
        %v699 = vsel %vm682, 1, 0
        %v700 = vsel %vm683, 1, 0
        %vm701 = vcmp.eq.s32.totalorder %v699, 1
        %vm702 = vcmp.eq.s32.totalorder %v700, 1
        %v703 = vsel %vm701, %v688, %v697
        %v704 = vsel %vm702, %v687, %v698
        %705 = vmatprep.subr.mxu0 0.0
        %706 = vmatpush1.msra.mxu0 %v506
        %707 = vmatprep.subr.mxu0 0.0
        %708 = vmatpush1.msra.mxu0 %v507
        %709 = vmatprep.subr.mxu0 0.0
        %710 = vmatpush1.msra.mxu0 %v508
        %711 = vmatprep.subr.mxu0 0.0
        %712 = vmatpush1.msra.mxu0 %v509
        %713 = vmatprep.subr.mxu0 0.0
        %714 = vmatpush1.msra.mxu0 %v510
        %715 = vmatprep.subr.mxu0 0.0
        %716 = vmatpush1.msra.mxu0 %v511
        %717 = vmatprep.subr.mxu0 0.0
        %718 = vmatpush1.msra.mxu0 %v512
        %719 = vmatprep.subr.mxu0 0.0
        %720 = vmatpush1.msra.mxu0 %v513
        %721 = vmatprep.subr.mxu0 0.0
        %722 = vmatpush1.msra.mxu0 %v514
        %723 = vmatprep.subr.mxu0 0.0
        %724 = vmatpush1.msra.mxu0 %v515
        %725 = vmatprep.subr.mxu0 0.0
        %726 = vmatpush1.msra.mxu0 %v516
        %727 = vmatprep.subr.mxu0 0.0
        %728 = vmatpush1.msra.mxu0 %v517
        %729 = vmatprep.subr.mxu0 0.0
        %730 = vmatpush1.msra.mxu0 %v518
        %731 = vmatprep.subr.mxu0 0.0
        %732 = vmatpush1.msra.mxu0 %v519
        %733 = vmatprep.subr.mxu0 0.0
        %734 = vmatpush1.msra.mxu0 %v520
        %735 = vmatprep.subr.mxu0 0.0
        %736 = vmatpush1.msra.mxu0 %v521
        %737 = vmatprep.subr.mxu0 0.0
        %738 = vmatpush1.msra.mxu0 0.0
        %739 = vmatprep.subr.mxu0 0.0
        %740 = vmatpush1.msra.mxu0 0.0
        %741 = vmatprep.subr.mxu0 0.0
        %742 = vmatpush1.msra.mxu0 0.0
        %743 = vmatprep.subr.mxu0 0.0
        %744 = vmatpush1.msra.mxu0 0.0
        %745 = vmatprep.subr.mxu0 0.0
        %746 = vmatpush1.msra.mxu0 0.0
        %747 = vmatprep.subr.mxu0 0.0
        %748 = vmatpush1.msra.mxu0 0.0
        %749 = vmatprep.subr.mxu0 0.0
        %750 = vmatpush1.msra.mxu0 0.0
        %751 = vmatprep.subr.mxu0 0.0
        %752 = vmatpush1.msra.mxu0 0.0
        %753 = vmatprep.subr.mxu0 0.0
        %754 = vmatpush1.msra.mxu0 0.0
        %755 = vmatprep.subr.mxu0 0.0
        %756 = vmatpush1.msra.mxu0 0.0
        %757 = vmatprep.subr.mxu0 0.0
        %758 = vmatpush1.msra.mxu0 0.0
        %759 = vmatprep.subr.mxu0 0.0
        %760 = vmatpush1.msra.mxu0 0.0
        %761 = vmatprep.subr.mxu0 0.0
        %762 = vmatpush1.msra.mxu0 0.0
        %763 = vmatprep.subr.mxu0 0.0
        %764 = vmatpush1.msra.mxu0 0.0
        %765 = vmatprep.subr.mxu0 0.0
        %766 = vmatpush1.msra.mxu0 0.0
        %767 = vmatprep.subr.mxu0 0.0
        %768 = vmatpush1.msra.mxu0 0.0
        %769 = vmatprep.mubr.f32.mxu0 0.0
        %770 = vmatmul.mubr.f32.gmra.mrb[0].mxu0 %v307
        %v771 = vpop.f32.mrb[0].mxu0
        %v772 = vadd.f32 %v680, %v771
        %v773 = vpop.f32.mrb[0].mxu0
        %774 = vmatprep.mubr.f32.mxu0 0.0
        %775 = vmatmul.mubr.f32.gmra.mrb[0].mxu0 %v308
        %v776 = vpop.f32.mrb[0].mxu0
        %v777 = vadd.f32 %v681, %v776
        %v778 = vpop.f32.mrb[0].mxu0
        %779 = vdwg.mxu0
        %v780 = vadd.f32 %v772, %v703
        %v781 = vadd.f32 %v777, %v704
        %v782 = vld [vmem:[%s3] sm:$0x1]
        %v784 = vlaneseq
        %v785 = vshrl.u32 %v784, 7
        %v786 = vsub.s32 0, %v785
        %v787 = vrot.slane %v782, %v786
        %v789 = vadd.f32 %v780, %v787
        %v790 = vadd.f32 %v781, %v787
        %v791 = vadd.f32 %v789, %v307
        %v792 = vadd.f32 %v790, %v308
        %793 = vst [vmem:[%s300] sm:$0xff] %v791
        %794 = vst [vmem:[%s300 + $0x8] sm:$0xff] %v792
        %s795 = sand.u32 %s152, 1
        %s796 = scalar_lea.sflag [#allocation4], %s795
        %s797 = sand.u32 %s152, 1
        %s798 = smul.addr %s797, 16
        %s799 = scalar_lea.vmem [#allocation8], %s798
        // Predicated region
        $region49: #{tpu_custom_call.1} parent=35 // pred_check
          %p800 = pneg %p162
        $region50: #{tpu_custom_call.1} parent=35 // pred_check_branch
          %802 = sbr.rel (%p800) target = $region52
        $region51: #{tpu_custom_call.1} parent=35 // pred_region
          %s803 = smul.u32 2, %s29
          %s805 = ssub.s32 256, 256
          %806 = vsyncadd %s796, %s805
          %s807 = smul.addr %s28, 2
          %s808 = sadd.s32 %s803, %s807
          %s809 = smul.addr %s808, 128
          %s810 = scalar_lea.hbm %s4, %s809
          %s811 = sshll.u32 %s799, 4
          %s812 = int_to_ptr.vmem [resolvable:$true] %s811
          %817 = dma.vmem_to_hbm [thread:$0]  %s812, 256, %s810, %s796, 128, 128, 8
        $region52: #{tpu_custom_call.1} parent=35 // pred_fallthru
          _
      $region36: #{tpu_custom_call.1} parent=5 // pred_fallthru
        _
      %p818 = scmp.le.s32.totalorder 2, %s19
      // Predicated region
      $region53: #{tpu_custom_call.1} parent=5 // pred_check
        %p819 = pneg %p818
      $region54: #{tpu_custom_call.1} parent=5 // pred_check_branch
        %821 = sbr.rel (%p819) target = $region56
      $region55: #{tpu_custom_call.1} parent=5 // pred_region
        %s822 = ssub.s32 %s19, 2
        // Predicated region
        $region57: #{tpu_custom_call.1} parent=55 // pred_check
          %p823 = pneg %p168
        $region58: #{tpu_custom_call.1} parent=55 // pred_check_branch
          %825 = sbr.rel (%p823) target = $region60
        $region59: #{tpu_custom_call.1} parent=55 // pred_region
          %s826 = sand.u32 %s153, 1
          %s827 = scalar_lea.sflag [#allocation4], %s826
          %s828 = sand.u32 %s153, 1
          %s829 = smul.addr %s828, 16
          %s830 = scalar_lea.vmem [#allocation8], %s829
          %831 = dma.done %s827, 256
        $region60: #{tpu_custom_call.1} parent=55 // pred_fallthru
          _
      $region56: #{tpu_custom_call.1} parent=5 // pred_fallthru
        _
    $region6: #{tpu_custom_call.1} parent=1 // loop_footer
      %s23 = sadd.s32 1, %s19
    $region7: #{tpu_custom_call.1} parent=1 // loop_footer_branch
      %18 = sbr.rel target = $region3
    $region8: #{tpu_custom_call.1} parent=1 // loop_exit
      _
    %832 = vsyncpa [#allocation3], 1
    %s833 = scalar_lea.sflag [#allocation3], 1
    %834 = vsyncpa %s833, 1
    %835 = vsyncpa [#allocation6], 1
    %s836 = scalar_lea.sflag [#allocation6], 1
    %837 = vsyncpa %s836, 1
    %838 = vsyncpa [#allocation4], 1
    %s839 = scalar_lea.sflag [#allocation4], 1
    %840 = vsyncpa %s839, 1

</llo_original>
